<compile_context>
chip_gen: v5e
topology: v5e:2x2
jax: 0.10.0
libtpu: 0.0.40
codegen_flags: <defaults>
</compile_context>

<pallas_src>
import jax
import jax.numpy as jnp
from jax.experimental import pallas as pl
from jax.experimental.pallas import tpu as pltpu


LANES = 128  # TPU vreg lane width


def _round_up(v, m):
    return -(-v // m) * m


def _block_diag(block, g):
    """g copies of `block` (r, c) on the diagonal of a (g*r, g*c) matrix."""
    r, c = block.shape
    eye = jnp.eye(g, dtype=block.dtype)
    out = eye[:, None, :, None] * block[None, :, None, :]   # (g, r, g, c)
    return out.reshape(g * r, g * c)


def mlp_kernel(x_ref, w1_ref, b1_ref, w2_ref, b2_ref, o_ref):
    # x_ref : (TILE_R, 128)           TILE_R packed rows; each row = 32 batch rows x 4 feats
    # w1_ref: (128, 32*HID)           block-diagonal fc1 weight (W1^T repeated)
    # b1_ref: (1,   32*HID)
    # w2_ref: (32*HID, 32*OUT)        block-diagonal fc2 weight (W2^T repeated)
    # b2_ref: (1,   32*OUT)
    # o_ref : (TILE_R, 32*OUT)        lane-dense packed output
    x = x_ref[...]
    # fc1 + ReLU (per packed group, the off-diagonal MACs are exact zeros).
    # Optional (review): cast x / weights to bf16 here (keep preferred f32 acc) to
    # guarantee the MXU stays hidden on v5e/v7x, at bf16-level numerics.
    h = jnp.dot(x, w1_ref[...], preferred_element_type=jnp.float32)
    h = jnp.maximum(h + b1_ref[...], 0.0)
    # fc2
    y = jnp.dot(h, w2_ref[...], preferred_element_type=jnp.float32)
    o_ref[...] = (y + b2_ref[...]).astype(o_ref.dtype)


def mlp_forward(x, w1, b1, w2, b2, *, tile_rows=2048):
    """Forward pass of Linear(4,10) -> ReLU -> Linear(10,3).

    x: (B, 4) f32; w1: (10, 4); b1: (10,); w2: (3, 10); b2: (3,)  (PyTorch layouts).
    Returns (B, 3) f32.  tile_rows = packed 128-lane rows per grid step
    (32 batch rows each); default 2048 == 65536 batch rows / step.
    """
    B, in_f = x.shape
    hid, out_f = w1.shape[0], w2.shape[0]
    g = LANES // in_f                                   # 32 batch rows per 128-lane row

    # ---- pack the batch into the lane dim WITHOUT moving data -----------------
    # Row-major (B, 4) -> (B/32, 128) is a metadata-only reshape; only a ragged
    # tail needs a (cheap) pad.  No transpose, no full-array re-materialization.
    bp = _round_up(B, g)
    if bp != B:
        x = jnp.pad(x, ((0, bp - B), (0, 0)))           # only when B % 32 != 0
    rows = bp // g
    xr = x.reshape(rows, g * in_f)                      # (rows, 128), lane-dense

    # ---- expanded block-diagonal weights (built once, VMEM-resident) ----------
    w1e = _block_diag(w1.T, g)                          # (128, 320)
    w2e = _block_diag(w2.T, g)                          # (320, 96)
    b1e = jnp.tile(b1, g).reshape(1, g * hid)           # (1, 320)
    b2e = jnp.tile(b2, g).reshape(1, g * out_f)         # (1, 96)

    # ---- tiling ---------------------------------------------------------------
    # VMEM/step ~ 4.5 KiB * tile_rows (double-buffered x + out, plus h/y temps);
    # tile_rows=2048 ~ 9 MiB -> fits v5e/v6e/v7x scoped-VMEM defaults.  Sweep
    # 1024-4096 per generation; >2048 on v5e needs vmem_limit_bytes.
    eff_tile = max(8, min(_round_up(tile_rows, 8), _round_up(rows, 8)))
    # Keep >= 8 grid steps for big batches so the v7x megacore split still gets
    # >= 4 pipelined steps per TensorCore.
    if rows >= 8 * 256:
        eff_tile = min(eff_tile, _round_up(pl.cdiv(rows, 8), 8))
    num_tiles = pl.cdiv(rows, eff_tile)

    cost = pl.CostEstimate(
        flops=2 * B * (in_f * hid + hid * out_f),                     # ~140 * B
        transcendentals=0,
        bytes_accessed=4 * (bp * in_f + bp * out_f + w1e.size + w2e.size),
    )

    out = pl.pallas_call(
        mlp_kernel,
        out_shape=jax.ShapeDtypeStruct((rows, g * out_f), x.dtype),
        grid=(num_tiles,),
        in_specs=[
            pl.BlockSpec((eff_tile, g * in_f), lambda i: (i, 0)),     # x, streamed
            pl.BlockSpec((g * in_f, g * hid), lambda i: (0, 0)),      # W1e, resident
            pl.BlockSpec((1, g * hid), lambda i: (0, 0)),             # b1e, resident
            pl.BlockSpec((g * hid, g * out_f), lambda i: (0, 0)),     # W2e, resident
            pl.BlockSpec((1, g * out_f), lambda i: (0, 0)),           # b2e, resident
        ],
        out_specs=pl.BlockSpec((eff_tile, g * out_f), lambda i: (i, 0)),
        compiler_params=pltpu.CompilerParams(
            dimension_semantics=("parallel",),                        # megacore on v7x
        ),
        cost_estimate=cost,
    )(xr, w1e, b1e, w2e, b2e)

    # (rows, 96) -> (bp, 3) is again a metadata-only row-major reshape; drop pad.
    return out.reshape(bp, out_f)[:B]


def init_params(key):
    # Deterministic init mimicking PyTorch nn.Linear defaults, in PyTorch's native
    # (out_features, in_features) weight layout.
    k1, k2, k3, k4 = jax.random.split(key, 4)
    in1, hid, out = 4, 10, 3
    bound1 = 1.0 / jnp.sqrt(in1)
    bound2 = 1.0 / jnp.sqrt(hid)
    w1 = jax.random.uniform(k1, (hid, in1), jnp.float32, -bound1, bound1)
    b1 = jax.random.uniform(k2, (hid,), jnp.float32, -bound1, bound1)
    w2 = jax.random.uniform(k3, (out, hid), jnp.float32, -bound2, bound2)
    b2 = jax.random.uniform(k4, (out,), jnp.float32, -bound2, bound2)
    return w1, b1, w2, b2


if __name__ == "__main__":
    key = jax.random.PRNGKey(0)
    k_x, k_p = jax.random.split(key)

    # Small demo: batch=520 is deliberately NOT a multiple of the 32-row lane pack
    # (exercises the ragged-tail pad), and tile_rows=8 on 17 packed rows gives a
    # 3-step grid with a partial last block (exercises pipelining + partial blocks).
    batch = 520
    x = jax.random.normal(k_x, (batch, 4), jnp.float32)
    w1, b1, w2, b2 = init_params(k_p)

    out = mlp_forward(x, w1, b1, w2, b2, tile_rows=8)
    out = jax.block_until_ready(out)

    # Reference in plain JAX (same math as the PyTorch module), full f32 precision.
    hi = jax.lax.Precision.HIGHEST
    ref = jnp.maximum(jnp.dot(x, w1.T, precision=hi) + b1, 0.0)
    ref = jnp.dot(ref, w2.T, precision=hi) + b2

    assert out.shape == (batch, 3)
    assert jnp.allclose(out, ref, atol=1e-4, rtol=1e-4)

    print("KERNEL_OK")
</pallas_src>

<mosaic_0001>
module attributes {stable_mosaic.version = 11 : i64} {
  func.func @mlp_kernel(%arg0: i32, %arg1: memref<8x128xf32, #tpu.memory_space<vmem>>, %arg2: memref<128x320xf32, #tpu.memory_space<vmem>>, %arg3: memref<1x320xf32, #tpu.memory_space<vmem>>, %arg4: memref<320x96xf32, #tpu.memory_space<vmem>>, %arg5: memref<1x96xf32, #tpu.memory_space<vmem>>, %arg6: memref<8x96xf32, #tpu.memory_space<vmem>>) attributes {dimension_semantics = [#tpu.dimension_semantics<parallel>], iteration_bounds = array<i64: 3>, scalar_prefetch = 0 : i64, scratch_operands = 0 : i64, tpu.core_type = #tpu.core_type<tc>, window_params = [{transform_indices = @transform_0, window_bounds = array<i64: 8, 128>}, {pipeline_mode = #tpu.pipeline_mode<synchronous>, transform_indices = @transform_1, window_bounds = array<i64: 128, 320>}, {pipeline_mode = #tpu.pipeline_mode<synchronous>, transform_indices = @transform_2, window_bounds = array<i64: 1, 320>}, {pipeline_mode = #tpu.pipeline_mode<synchronous>, transform_indices = @transform_3, window_bounds = array<i64: 320, 96>}, {pipeline_mode = #tpu.pipeline_mode<synchronous>, transform_indices = @transform_4, window_bounds = array<i64: 1, 96>}, {transform_indices = @transform_5, window_bounds = array<i64: 8, 96>}]} {
    %c0 = arith.constant 0 : index
    %c0_0 = arith.constant 0 : index
    %0 = vector.load %arg1[%c0, %c0_0] : memref<8x128xf32, #tpu.memory_space<vmem>>, vector<8x128xf32>
    %c0_1 = arith.constant 0 : index
    %c0_2 = arith.constant 0 : index
    %1 = vector.load %arg2[%c0_1, %c0_2] : memref<128x320xf32, #tpu.memory_space<vmem>>, vector<128x320xf32>
    %cst = arith.constant dense<0.000000e+00> : vector<8x320xf32>
    %2 = tpu.matmul %0, %1, %cst {dimension_numbers = #tpu.dot_dimension_numbers<[1], [0], [0], [1], [0, 0, 1, 1], [], []>} : vector<8x128xf32>, vector<128x320xf32>, vector<8x320xf32> -> vector<8x320xf32>
    %c0_3 = arith.constant 0 : index
    %c0_4 = arith.constant 0 : index
    %3 = vector.load %arg3[%c0_3, %c0_4] : memref<1x320xf32, #tpu.memory_space<vmem>>, vector<1x320xf32>
    %4 = vector.broadcast %3 : vector<1x320xf32> to vector<8x320xf32>
    %5 = arith.addf %2, %4 : vector<8x320xf32>
    %cst_5 = arith.constant 0.000000e+00 : f32
    %6 = vector.broadcast %cst_5 : f32 to vector<8x320xf32>
    %7 = arith.maximumf %5, %6 : vector<8x320xf32>
    %c0_6 = arith.constant 0 : index
    %c0_7 = arith.constant 0 : index
    %8 = vector.load %arg4[%c0_6, %c0_7] : memref<320x96xf32, #tpu.memory_space<vmem>>, vector<320x96xf32>
    %cst_8 = arith.constant dense<0.000000e+00> : vector<8x96xf32>
    %9 = tpu.matmul %7, %8, %cst_8 {dimension_numbers = #tpu.dot_dimension_numbers<[1], [0], [0], [1], [0, 0, 1, 1], [], []>} : vector<8x320xf32>, vector<320x96xf32>, vector<8x96xf32> -> vector<8x96xf32>
    %c0_9 = arith.constant 0 : index
    %c0_10 = arith.constant 0 : index
    %10 = vector.load %arg5[%c0_9, %c0_10] : memref<1x96xf32, #tpu.memory_space<vmem>>, vector<1x96xf32>
    %11 = vector.broadcast %10 : vector<1x96xf32> to vector<8x96xf32>
    %12 = arith.addf %9, %11 : vector<8x96xf32>
    %c0_11 = arith.constant 0 : index
    %c0_12 = arith.constant 0 : index
    %13 = vector.load %arg6[%c0_11, %c0_12] : memref<8x96xf32, #tpu.memory_space<vmem>>, vector<8x96xf32>
    tpu.vector_store %arg6[%c0_11, %c0_12], %12 {strides = array<i32>} : memref<8x96xf32, #tpu.memory_space<vmem>>, vector<8x96xf32>,
    return
  }
  func.func @transform_0(%arg0: i32) -> (i32, i32) {
    %c0_i32 = arith.constant 0 : i32
    %c0_i32_0 = arith.constant 0 : i32
    return %arg0, %c0_i32 : i32, i32
  }
  func.func @transform_1(%arg0: i32) -> (i32, i32) {
    %c0_i32 = arith.constant 0 : i32
    %c0_i32_0 = arith.constant 0 : i32
    %c0_i32_1 = arith.constant 0 : i32
    return %c0_i32, %c0_i32_0 : i32, i32
  }
  func.func @transform_2(%arg0: i32) -> (i32, i32) {
    %c0_i32 = arith.constant 0 : i32
    %c0_i32_0 = arith.constant 0 : i32
    %c0_i32_1 = arith.constant 0 : i32
    return %c0_i32, %c0_i32_0 : i32, i32
  }
  func.func @transform_3(%arg0: i32) -> (i32, i32) {
    %c0_i32 = arith.constant 0 : i32
    %c0_i32_0 = arith.constant 0 : i32
    %c0_i32_1 = arith.constant 0 : i32
    return %c0_i32, %c0_i32_0 : i32, i32
  }
  func.func @transform_4(%arg0: i32) -> (i32, i32) {
    %c0_i32 = arith.constant 0 : i32
    %c0_i32_0 = arith.constant 0 : i32
    %c0_i32_1 = arith.constant 0 : i32
    return %c0_i32, %c0_i32_0 : i32, i32
  }
  func.func @transform_5(%arg0: i32) -> (i32, i32) {
    %c0_i32 = arith.constant 0 : i32
    %c0_i32_0 = arith.constant 0 : i32
    return %arg0, %c0_i32 : i32, i32
  }
}

</mosaic_0001>

<llo_original>
// kernel: tpu_custom_call.1
$region0: #{tpu_custom_call.1}
  #allocation0 [shape = 'u32[]', space=smem, size = 0x4, offset = 0x4, fixed_abs, tag = 'smem constant byte address 0x4 - core index']
  #allocation1 [shape = 'u32[72,128]{1,0:T(1,128)}', space=vmem, size = 0x9000, scoped, tag = 'internal scratch']
  %s0 = inlined_call_operand.vmem [shape: f32[17,128], index: 0, kind: input, shape index: {}]
  %s1 = inlined_call_operand.vmem [shape: f32[128,320], index: 1, kind: input, shape index: {}]
  %s2 = inlined_call_operand.vmem [shape: f32[1,320], index: 2, kind: input, shape index: {}]
  %s3 = inlined_call_operand.vmem [shape: f32[320,96], index: 3, kind: input, shape index: {}]
  %s4 = inlined_call_operand.vmem [shape: f32[1,96], index: 4, kind: input, shape index: {}]
  %s5 = inlined_call_operand.hbm [shape: f32[17,96], index: 5, kind: output, shape index: {}]
  %s6 = sld [smem:[#allocation0]]
  $region53: #{tpu_custom_call.1} parent=0
    _
  %s8 = ssub.s32 1, %s6
  %s9 = scalar_select 0, %s8, %s6
  $region1: #{tpu_custom_call.1} parent=0
    #allocation2 [shape = 'u8[8192]{0}', space=vmem, size = 0x2000, scoped, tag = 'output window, operand 0']
    #allocation3 [shape = 's32[2]{0}', space=sflag, size = 0x8, scoped, tag = 'scoped memory for tpu_custom_call.1']
    %10 = vsyncpa [#allocation3], 0
    %s11 = scalar_lea.sflag [#allocation3], 1
    %12 = vsyncpa %s11, 0
    loop: start=0, step=1, limit=5
    $region2: #{tpu_custom_call.1} parent=1 // loop_pre_header
      _
    $region3: #{tpu_custom_call.1} parent=1 // loop_header
      %s14 = sphi 0, %s18
      %p15 = scmp.ge.s32.totalorder %s14, 5
      %s24 = sphi 0, %s26
      %s27 = sphi 0, %s24
      %s28 = sphi 0, %s27
      %s44 = sphi 0, %s28
      %s48 = sphi 0, %s48
      %s50 = sphi 0, %s48
      %s51 = sphi 0, %s50
      %s65 = sphi 0, %s51
      %s69 = sphi 0, %s69
      %s71 = sphi 0, %s69
      %s72 = sphi 0, %s71
      %s86 = sphi 0, %s72
      %s90 = sphi 0, %s90
      %s92 = sphi 0, %s90
      %s93 = sphi 0, %s92
      %s107 = sphi 0, %s93
      %s111 = sphi 0, %s111
      %s113 = sphi 0, %s111
      %s114 = sphi 0, %s113
      %s128 = sphi 0, %s114
      %s134 = sphi 0, %s136
      %s137 = sphi 0, %s134
      %s138 = sphi 0, %s137
      %s154 = sphi 0, %s138
    $region4: #{tpu_custom_call.1} parent=1 // loop_header_branch
      %17 = sbr.rel (%p15) target = $region8
    $region5: #{tpu_custom_call.1} parent=1 // loop_body
      %s19 = ssub.s32 %s14, 1
      %s20 = ssub.s32 %s14, 2
      %s21 = sadd.s32 %s14, 1
      %s22 = ssub.s32 %s14, %s21
      %p23 = scmp.eq.s32.totalorder %s22, 0
      %s25 = sadd.s32 %s24, 1
      %s26 = scalar_select %p23, %s24, %s25
      %p29 = pneg %p23
      %p30 = scmp.eq.s32.totalorder %s14, 2
      %p31 = por %p29, %p30
      %p32 = scmp.ne.s32.totalorder %s24, %s27
      %p33 = scmp.eq.s32.totalorder %s14, 0
      %p34 = por %p32, %p33
      %p35 = scmp.ne.s32.totalorder %s24, %s27
      %p36 = scmp.eq.s32.totalorder %s19, 2
      %p37 = por %p35, %p36
      %p38 = scmp.ne.s32.totalorder %s27, %s28
      %p39 = scmp.eq.s32.totalorder %s19, 0
      %p40 = por %p38, %p39
      %p41 = scmp.ne.s32.totalorder %s27, %s28
      %p42 = scmp.eq.s32.totalorder %s20, 2
      %p43 = por %p41, %p42
      %p45 = scmp.ne.s32.totalorder %s28, %s44
      %p46 = scmp.eq.s32.totalorder %s20, 0
      %p47 = por %p45, %p46
      %s49 = sadd.s32 %s48, 1
      %p52 = scmp.eq.s32.totalorder %s14, 2
      %p53 = scmp.ne.s32.totalorder %s48, %s50
      %p54 = scmp.eq.s32.totalorder %s14, 0
      %p55 = por %p53, %p54
      %p56 = scmp.ne.s32.totalorder %s48, %s50
      %p57 = scmp.eq.s32.totalorder %s19, 2
      %p58 = por %p56, %p57
      %p59 = scmp.ne.s32.totalorder %s50, %s51
      %p60 = scmp.eq.s32.totalorder %s19, 0
      %p61 = por %p59, %p60
      %p62 = scmp.ne.s32.totalorder %s50, %s51
      %p63 = scmp.eq.s32.totalorder %s20, 2
      %p64 = por %p62, %p63
      %p66 = scmp.ne.s32.totalorder %s51, %s65
      %p67 = scmp.eq.s32.totalorder %s20, 0
      %p68 = por %p66, %p67
      %s70 = sadd.s32 %s69, 1
      %p73 = scmp.eq.s32.totalorder %s14, 2
      %p74 = scmp.ne.s32.totalorder %s69, %s71
      %p75 = scmp.eq.s32.totalorder %s14, 0
      %p76 = por %p74, %p75
      %p77 = scmp.ne.s32.totalorder %s69, %s71
      %p78 = scmp.eq.s32.totalorder %s19, 2
      %p79 = por %p77, %p78
      %p80 = scmp.ne.s32.totalorder %s71, %s72
      %p81 = scmp.eq.s32.totalorder %s19, 0
      %p82 = por %p80, %p81
      %p83 = scmp.ne.s32.totalorder %s71, %s72
      %p84 = scmp.eq.s32.totalorder %s20, 2
      %p85 = por %p83, %p84
      %p87 = scmp.ne.s32.totalorder %s72, %s86
      %p88 = scmp.eq.s32.totalorder %s20, 0
      %p89 = por %p87, %p88
      %s91 = sadd.s32 %s90, 1
      %p94 = scmp.eq.s32.totalorder %s14, 2
      %p95 = scmp.ne.s32.totalorder %s90, %s92
      %p96 = scmp.eq.s32.totalorder %s14, 0
      %p97 = por %p95, %p96
      %p98 = scmp.ne.s32.totalorder %s90, %s92
      %p99 = scmp.eq.s32.totalorder %s19, 2
      %p100 = por %p98, %p99
      %p101 = scmp.ne.s32.totalorder %s92, %s93
      %p102 = scmp.eq.s32.totalorder %s19, 0
      %p103 = por %p101, %p102
      %p104 = scmp.ne.s32.totalorder %s92, %s93
      %p105 = scmp.eq.s32.totalorder %s20, 2
      %p106 = por %p104, %p105
      %p108 = scmp.ne.s32.totalorder %s93, %s107
      %p109 = scmp.eq.s32.totalorder %s20, 0
      %p110 = por %p108, %p109
      %s112 = sadd.s32 %s111, 1
      %p115 = scmp.eq.s32.totalorder %s14, 2
      %p116 = scmp.ne.s32.totalorder %s111, %s113
      %p117 = scmp.eq.s32.totalorder %s14, 0
      %p118 = por %p116, %p117
      %p119 = scmp.ne.s32.totalorder %s111, %s113
      %p120 = scmp.eq.s32.totalorder %s19, 2
      %p121 = por %p119, %p120
      %p122 = scmp.ne.s32.totalorder %s113, %s114
      %p123 = scmp.eq.s32.totalorder %s19, 0
      %p124 = por %p122, %p123
      %p125 = scmp.ne.s32.totalorder %s113, %s114
      %p126 = scmp.eq.s32.totalorder %s20, 2
      %p127 = por %p125, %p126
      %p129 = scmp.ne.s32.totalorder %s114, %s128
      %p130 = scmp.eq.s32.totalorder %s20, 0
      %p131 = por %p129, %p130
      %s132 = ssub.s32 %s14, %s21
      %p133 = scmp.eq.s32.totalorder %s132, 0
      %s135 = sadd.s32 %s134, 1
      %s136 = scalar_select %p133, %s134, %s135
      %p139 = pneg %p133
      %p140 = scmp.eq.s32.totalorder %s14, 2
      %p141 = por %p139, %p140
      %p142 = scmp.ne.s32.totalorder %s134, %s137
      %p143 = scmp.eq.s32.totalorder %s14, 0
      %p144 = por %p142, %p143
      %p145 = scmp.ne.s32.totalorder %s134, %s137
      %p146 = scmp.eq.s32.totalorder %s19, 2
      %p147 = por %p145, %p146
      %p148 = scmp.ne.s32.totalorder %s137, %s138
      %p149 = scmp.eq.s32.totalorder %s19, 0
      %p150 = por %p148, %p149
      %p151 = scmp.ne.s32.totalorder %s137, %s138
      %p152 = scmp.eq.s32.totalorder %s20, 2
      %p153 = por %p151, %p152
      %p155 = scmp.ne.s32.totalorder %s138, %s154
      %p156 = scmp.eq.s32.totalorder %s20, 0
      %p157 = por %p155, %p156
      %p158 = scmp.le.s32.totalorder 1, %s14
      %p159 = scmp.lt.s32.totalorder %s14, 4
      %p160 = pnand %p158, %p159
      %p161 = pneg %p160
      // Predicated region
      $region9: #{tpu_custom_call.1} parent=5 // pred_check
        _
      $region10: #{tpu_custom_call.1} parent=5 // pred_check_branch
        %163 = sbr.rel (%p160) target = $region12
      $region11: #{tpu_custom_call.1} parent=5 // pred_region
        %s164 = ssub.s32 %s14, 1
        // Predicated region
        $region13: #{tpu_custom_call.1} parent=11 // pred_check
          %p165 = pneg %p61
        $region14: #{tpu_custom_call.1} parent=11 // pred_check_branch
          %167 = sbr.rel (%p165) target = $region16
        $region15: #{tpu_custom_call.1} parent=11 // pred_region
          _
        $region16: #{tpu_custom_call.1} parent=11 // pred_fallthru
          _
        // Predicated region
        $region17: #{tpu_custom_call.1} parent=11 // pred_check
          %p168 = pneg %p82
        $region18: #{tpu_custom_call.1} parent=11 // pred_check_branch
          %170 = sbr.rel (%p168) target = $region20
        $region19: #{tpu_custom_call.1} parent=11 // pred_region
          _
        $region20: #{tpu_custom_call.1} parent=11 // pred_fallthru
          _
        // Predicated region
        $region21: #{tpu_custom_call.1} parent=11 // pred_check
          %p171 = pneg %p103
        $region22: #{tpu_custom_call.1} parent=11 // pred_check_branch
          %173 = sbr.rel (%p171) target = $region24
        $region23: #{tpu_custom_call.1} parent=11 // pred_region
          _
        $region24: #{tpu_custom_call.1} parent=11 // pred_fallthru
          _
        // Predicated region
        $region25: #{tpu_custom_call.1} parent=11 // pred_check
          %p174 = pneg %p124
        $region26: #{tpu_custom_call.1} parent=11 // pred_check_branch
          %176 = sbr.rel (%p174) target = $region28
        $region27: #{tpu_custom_call.1} parent=11 // pred_region
          _
        $region28: #{tpu_custom_call.1} parent=11 // pred_fallthru
          _
      $region12: #{tpu_custom_call.1} parent=5 // pred_fallthru
        _
      %p177 = scmp.lt.s32.totalorder %s14, 3
      // Predicated region
      $region29: #{tpu_custom_call.1} parent=5 // pred_check
        %p178 = pneg %p177
      $region30: #{tpu_custom_call.1} parent=5 // pred_check_branch
        %180 = sbr.rel (%p178) target = $region32
      $region31: #{tpu_custom_call.1} parent=5 // pred_region
        // Predicated region
        $region33: #{tpu_custom_call.1} parent=31 // pred_check
          %p181 = pneg %p34
        $region34: #{tpu_custom_call.1} parent=31 // pred_check_branch
          %183 = sbr.rel (%p181) target = $region36
        $region35: #{tpu_custom_call.1} parent=31 // pred_region
          %p184 = scmp.lt.s32.totalorder %s14, 2
          %s185 = scalar_select %p184, %s14, 2
          %s186 = smul.addr %s185, 8
          %s187 = scalar_lea.vmem %s0, %s186
        $region36: #{tpu_custom_call.1} parent=31 // pred_fallthru
          _
      $region32: #{tpu_custom_call.1} parent=5 // pred_fallthru
        _
      %p188 = scmp.le.s32.totalorder 1, %s14
      %p189 = scmp.lt.s32.totalorder %s14, 4
      %p190 = pnand %p188, %p189
      %p191 = pneg %p190
      // Predicated region
      $region37: #{tpu_custom_call.1} parent=5 // pred_check
        _
      $region38: #{tpu_custom_call.1} parent=5 // pred_check_branch
        %193 = sbr.rel (%p190) target = $region40
      $region39: #{tpu_custom_call.1} parent=5 // pred_region
        %s194 = ssub.s32 %s14, 1
        %p195 = scmp.lt.s32.totalorder %s19, 2
        %s196 = scalar_select %p195, %s19, 2
        %s197 = smul.addr %s196, 8
        %s198 = scalar_lea.vmem %s0, %s197
        %p199 = pneg %p40
        %p200 = pneg %p37
        %p201 = pneg %p61
        %p202 = pneg %p58
        %p203 = pneg %p82
        %p204 = pneg %p79
        %p205 = pneg %p103
        %p206 = pneg %p100
        %p207 = pneg %p124
        %p208 = pneg %p121
        %p209 = pneg %p150
        %p210 = pneg %p147
        %s211 = sand.u32 %s137, 1
        %s212 = scalar_lea.sflag [#allocation3], %s211
        %s213 = sand.u32 %s137, 1
        %s214 = smul.addr %s213, 8
        %s215 = scalar_lea.vmem [#allocation2], %s214
        %p216 = scmp.lt.s32.totalorder %s19, 2
        %s217 = scalar_select %p216, %s19, 2
        %s218 = smul.addr %s217, 8
        %s219 = scalar_lea.vmem %s0, %s218
        %v220 = vld [vmem:[%s219] sm:$0xff]
        %v221 = vld [vmem:[%s1] sm:$0xff]
        %v222 = vld [vmem:[%s1 + $0x8] sm:$0xff]
        %v223 = vld [vmem:[%s1 + $0x10] sm:$0xff]
        %v224 = vld [vmem:[%s1 + $0x18] sm:$0xff]
        %v225 = vld [vmem:[%s1 + $0x20] sm:$0xff]
        %v226 = vld [vmem:[%s1 + $0x28] sm:$0xff]
        %v227 = vld [vmem:[%s1 + $0x30] sm:$0xff]
        %v228 = vld [vmem:[%s1 + $0x38] sm:$0xff]
        %v229 = vld [vmem:[%s1 + $0x40] sm:$0xff]
        %v230 = vld [vmem:[%s1 + $0x48] sm:$0xff]
        %v231 = vld [vmem:[%s1 + $0x50] sm:$0xff]
        %v232 = vld [vmem:[%s1 + $0x58] sm:$0xff]
        %v233 = vld [vmem:[%s1 + $0x60] sm:$0xff]
        %v234 = vld [vmem:[%s1 + $0x68] sm:$0xff]
        %v235 = vld [vmem:[%s1 + $0x70] sm:$0xff]
        %v236 = vld [vmem:[%s1 + $0x78] sm:$0xff]
        %v237 = vld [vmem:[%s1 + $0x80] sm:$0xff]
        %v238 = vld [vmem:[%s1 + $0x88] sm:$0xff]
        %v239 = vld [vmem:[%s1 + $0x90] sm:$0xff]
        %v240 = vld [vmem:[%s1 + $0x98] sm:$0xff]
        %v241 = vld [vmem:[%s1 + $0xa0] sm:$0xff]
        %v242 = vld [vmem:[%s1 + $0xa8] sm:$0xff]
        %v243 = vld [vmem:[%s1 + $0xb0] sm:$0xff]
        %v244 = vld [vmem:[%s1 + $0xb8] sm:$0xff]
        %v245 = vld [vmem:[%s1 + $0xc0] sm:$0xff]
        %v246 = vld [vmem:[%s1 + $0xc8] sm:$0xff]
        %v247 = vld [vmem:[%s1 + $0xd0] sm:$0xff]
        %v248 = vld [vmem:[%s1 + $0xd8] sm:$0xff]
        %v249 = vld [vmem:[%s1 + $0xe0] sm:$0xff]
        %v250 = vld [vmem:[%s1 + $0xe8] sm:$0xff]
        %v251 = vld [vmem:[%s1 + $0xf0] sm:$0xff]
        %v252 = vld [vmem:[%s1 + $0xf8] sm:$0xff]
        %v253 = vld [vmem:[%s1 + $0x100] sm:$0xff]
        %v254 = vld [vmem:[%s1 + $0x108] sm:$0xff]
        %v255 = vld [vmem:[%s1 + $0x110] sm:$0xff]
        %v256 = vld [vmem:[%s1 + $0x118] sm:$0xff]
        %v257 = vld [vmem:[%s1 + $0x120] sm:$0xff]
        %v258 = vld [vmem:[%s1 + $0x128] sm:$0xff]
        %v259 = vld [vmem:[%s1 + $0x130] sm:$0xff]
        %v260 = vld [vmem:[%s1 + $0x138] sm:$0xff]
        %v261 = vld [vmem:[%s1 + $0x140] sm:$0xff]
        %v262 = vld [vmem:[%s1 + $0x148] sm:$0xff]
        %v263 = vld [vmem:[%s1 + $0x150] sm:$0xff]
        %v264 = vld [vmem:[%s1 + $0x158] sm:$0xff]
        %v265 = vld [vmem:[%s1 + $0x160] sm:$0xff]
        %v266 = vld [vmem:[%s1 + $0x168] sm:$0xff]
        %v267 = vld [vmem:[%s1 + $0x170] sm:$0xff]
        %v268 = vld [vmem:[%s1 + $0x178] sm:$0xff]
        %v269 = vld [vmem:[%s2] sm:$0x7]
        %v271 = vperm.slane %v269, 0
        %v272 = vperm.slane %v269, 1
        %v273 = vperm.slane %v269, 2
        %277 = vmatpush.msra.mxu0 %v266
        %278 = vmatpush.msra.mxu0 %v263
        %279 = vmatpush.msra.mxu0 %v260
        %280 = vmatpush.msra.mxu0 %v257
        %281 = vmatpush.msra.mxu0 %v254
        %282 = vmatpush.msra.mxu0 %v251
        %283 = vmatpush.msra.mxu0 %v248
        %284 = vmatpush.msra.mxu0 %v245
        %285 = vmatpush.msra.mxu0 %v242
        %286 = vmatpush.msra.mxu0 %v239
        %287 = vmatpush.msra.mxu0 %v236
        %288 = vmatpush.msra.mxu0 %v233
        %289 = vmatpush.msra.mxu0 %v230
        %290 = vmatpush.msra.mxu0 %v227
        %291 = vmatpush.msra.mxu0 %v224
        %292 = vmatpush.msra.mxu0 %v221
        %293 = vmatmul.f32.gmra.mxu0 %v220
        %v294 = vpop.f32.mrf.mxu0
        %v295 = vadd.f32 %v271, %v294
        %296 = vdwg.mxu0
        %297 = vmatpush.msra.mxu0 %v267
        %298 = vmatpush.msra.mxu0 %v264
        %299 = vmatpush.msra.mxu0 %v261
        %300 = vmatpush.msra.mxu0 %v258
        %301 = vmatpush.msra.mxu0 %v255
        %302 = vmatpush.msra.mxu0 %v252
        %303 = vmatpush.msra.mxu0 %v249
        %304 = vmatpush.msra.mxu0 %v246
        %305 = vmatpush.msra.mxu0 %v243
        %306 = vmatpush.msra.mxu0 %v240
        %307 = vmatpush.msra.mxu0 %v237
        %308 = vmatpush.msra.mxu0 %v234
        %309 = vmatpush.msra.mxu0 %v231
        %310 = vmatpush.msra.mxu0 %v228
        %311 = vmatpush.msra.mxu0 %v225
        %312 = vmatpush.msra.mxu0 %v222
        %313 = vmatmul.f32.gmra.mxu0 %v220
        %v314 = vpop.f32.mrf.mxu0
        %v315 = vadd.f32 %v272, %v314
        %316 = vdwg.mxu0
        %317 = vmatpush.msra.mxu0 %v268
        %318 = vmatpush.msra.mxu0 %v265
        %319 = vmatpush.msra.mxu0 %v262
        %320 = vmatpush.msra.mxu0 %v259
        %321 = vmatpush.msra.mxu0 %v256
        %322 = vmatpush.msra.mxu0 %v253
        %323 = vmatpush.msra.mxu0 %v250
        %324 = vmatpush.msra.mxu0 %v247
        %325 = vmatpush.msra.mxu0 %v244
        %326 = vmatpush.msra.mxu0 %v241
        %327 = vmatpush.msra.mxu0 %v238
        %328 = vmatpush.msra.mxu0 %v235
        %329 = vmatpush.msra.mxu0 %v232
        %330 = vmatpush.msra.mxu0 %v229
        %331 = vmatpush.msra.mxu0 %v226
        %332 = vmatpush.msra.mxu0 %v223
        %333 = vmatmul.f32.gmra.mxu0 %v220
        %v334 = vpop.f32.mrf.mxu0
        %v335 = vadd.f32 %v273, %v334
        %336 = vdwg.mxu0
        %v337 = vmax.f32 %v295, 0.0
        %v338 = vmax.f32 %v315, 0.0
        %v339 = vmax.f32 %v335, 0.0
        %v340 = vld [vmem:[%s3] sm:$0xff]
        %v341 = vld [vmem:[%s3 + $0x8] sm:$0xff]
        %v342 = vld [vmem:[%s3 + $0x10] sm:$0xff]
        %v343 = vld [vmem:[%s3 + $0x18] sm:$0xff]
        %v344 = vld [vmem:[%s3 + $0x20] sm:$0xff]
        %v345 = vld [vmem:[%s3 + $0x28] sm:$0xff]
        %v346 = vld [vmem:[%s3 + $0x30] sm:$0xff]
        %v347 = vld [vmem:[%s3 + $0x38] sm:$0xff]
        %v348 = vld [vmem:[%s3 + $0x40] sm:$0xff]
        %v349 = vld [vmem:[%s3 + $0x48] sm:$0xff]
        %v350 = vld [vmem:[%s3 + $0x50] sm:$0xff]
        %v351 = vld [vmem:[%s3 + $0x58] sm:$0xff]
        %v352 = vld [vmem:[%s3 + $0x60] sm:$0xff]
        %v353 = vld [vmem:[%s3 + $0x68] sm:$0xff]
        %v354 = vld [vmem:[%s3 + $0x70] sm:$0xff]
        %v355 = vld [vmem:[%s3 + $0x78] sm:$0xff]
        %v356 = vld [vmem:[%s3 + $0x80] sm:$0xff]
        %v357 = vld [vmem:[%s3 + $0x88] sm:$0xff]
        %v358 = vld [vmem:[%s3 + $0x90] sm:$0xff]
        %v359 = vld [vmem:[%s3 + $0x98] sm:$0xff]
        %v360 = vld [vmem:[%s3 + $0xa0] sm:$0xff]
        %v361 = vld [vmem:[%s3 + $0xa8] sm:$0xff]
        %v362 = vld [vmem:[%s3 + $0xb0] sm:$0xff]
        %v363 = vld [vmem:[%s3 + $0xb8] sm:$0xff]
        %v364 = vld [vmem:[%s3 + $0xc0] sm:$0xff]
        %v365 = vld [vmem:[%s3 + $0xc8] sm:$0xff]
        %v366 = vld [vmem:[%s3 + $0xd0] sm:$0xff]
        %v367 = vld [vmem:[%s3 + $0xd8] sm:$0xff]
        %v368 = vld [vmem:[%s3 + $0xe0] sm:$0xff]
        %v369 = vld [vmem:[%s3 + $0xe8] sm:$0xff]
        %v370 = vld [vmem:[%s3 + $0xf0] sm:$0xff]
        %v371 = vld [vmem:[%s3 + $0xf8] sm:$0xff]
        %v372 = vld [vmem:[%s3 + $0x100] sm:$0xff]
        %v373 = vld [vmem:[%s3 + $0x108] sm:$0xff]
        %v374 = vld [vmem:[%s3 + $0x110] sm:$0xff]
        %v375 = vld [vmem:[%s3 + $0x118] sm:$0xff]
        %v376 = vld [vmem:[%s3 + $0x120] sm:$0xff]
        %v377 = vld [vmem:[%s3 + $0x128] sm:$0xff]
        %v378 = vld [vmem:[%s3 + $0x130] sm:$0xff]
        %v379 = vld [vmem:[%s3 + $0x138] sm:$0xff]
        %v380 = vld [vmem:[%s4] sm:$0x1]
        %v382 = vperm.slane %v380, 0
        %vm384 = vcmask 523264
        %v386 = vsel %vm384, %v339, 0
        %388 = vmatpush.msra.mxu0 %v355
        %389 = vmatpush.msra.mxu0 %v354
        %390 = vmatpush.msra.mxu0 %v353
        %391 = vmatpush.msra.mxu0 %v352
        %392 = vmatpush.msra.mxu0 %v351
        %393 = vmatpush.msra.mxu0 %v350
        %394 = vmatpush.msra.mxu0 %v349
        %395 = vmatpush.msra.mxu0 %v348
        %396 = vmatpush.msra.mxu0 %v347
        %397 = vmatpush.msra.mxu0 %v346
        %398 = vmatpush.msra.mxu0 %v345
        %399 = vmatpush.msra.mxu0 %v344
        %400 = vmatpush.msra.mxu0 %v343
        %401 = vmatpush.msra.mxu0 %v342
        %402 = vmatpush.msra.mxu0 %v341
        %403 = vmatpush.msra.mxu0 %v340
        %404 = vmatmul.f32.gmra.mxu0 %v337
        %v405 = vpop.f32.mrf.mxu0
        %v406 = vadd.f32 %v382, %v405
        %407 = vdwg.mxu0
        %408 = vmatpush.msra.mxu0 %v371
        %409 = vmatpush.msra.mxu0 %v370
        %410 = vmatpush.msra.mxu0 %v369
        %411 = vmatpush.msra.mxu0 %v368
        %412 = vmatpush.msra.mxu0 %v367
        %413 = vmatpush.msra.mxu0 %v366
        %414 = vmatpush.msra.mxu0 %v365
        %415 = vmatpush.msra.mxu0 %v364
        %416 = vmatpush.msra.mxu0 %v363
        %417 = vmatpush.msra.mxu0 %v362
        %418 = vmatpush.msra.mxu0 %v361
        %419 = vmatpush.msra.mxu0 %v360
        %420 = vmatpush.msra.mxu0 %v359
        %421 = vmatpush.msra.mxu0 %v358
        %422 = vmatpush.msra.mxu0 %v357
        %423 = vmatpush.msra.mxu0 %v356
        %424 = vmatmul.f32.gmra.mxu0 %v338
        %v425 = vpop.f32.mrf.mxu0
        %v426 = vadd.f32 %v406, %v425
        %427 = vdwg.mxu0
        %428 = vmatpush.msra.mxu0 0.0
        %429 = vmatpush.msra.mxu0 0.0
        %430 = vmatpush.msra.mxu0 0.0
        %431 = vmatpush.msra.mxu0 0.0
        %432 = vmatpush.msra.mxu0 0.0
        %433 = vmatpush.msra.mxu0 0.0
        %434 = vmatpush.msra.mxu0 0.0
        %435 = vmatpush.msra.mxu0 0.0
        %436 = vmatpush.msra.mxu0 %v379
        %437 = vmatpush.msra.mxu0 %v378
        %438 = vmatpush.msra.mxu0 %v377
        %439 = vmatpush.msra.mxu0 %v376
        %440 = vmatpush.msra.mxu0 %v375
        %441 = vmatpush.msra.mxu0 %v374
        %442 = vmatpush.msra.mxu0 %v373
        %443 = vmatpush.msra.mxu0 %v372
        %444 = vmatmul.f32.gmra.mxu0 %v386
        %v445 = vpop.f32.mrf.mxu0
        %v446 = vadd.f32 %v426, %v445
        %447 = vdwg.mxu0
        %vm448 = vcmask 785408
        %449 = vst.msk [vmem:[%s215] sm:$0xff] %vm448, %v446
        %s450 = sand.u32 %s137, 1
        %s451 = scalar_lea.sflag [#allocation3], %s450
        %s452 = sand.u32 %s137, 1
        %s453 = smul.addr %s452, 8
        %s454 = scalar_lea.vmem [#allocation2], %s453
        // Predicated region
        $region41: #{tpu_custom_call.1} parent=39 // pred_check
          %p455 = pneg %p147
        $region42: #{tpu_custom_call.1} parent=39 // pred_check_branch
          %457 = sbr.rel (%p455) target = $region44
        $region43: #{tpu_custom_call.1} parent=39 // pred_region
          %459 = vsyncadd %s451, 0
          %s460 = smul.addr %s19, 8
          %s461 = scalar_lea.hbm %s5, %s460
          %s463 = sshll.u32 %s454, 4
          %s464 = int_to_ptr.vmem [resolvable:$true] %s463
          %s465 = sshll.u32 %s461, 4
          %s466 = int_to_ptr.hbm [resolvable:$true] %s465
          %468 = dma.vmem_to_hbm [thread:$0]  %s464, 128, %s466, %s451
        $region44: #{tpu_custom_call.1} parent=39 // pred_fallthru
          _
      $region40: #{tpu_custom_call.1} parent=5 // pred_fallthru
        _
      %p469 = scmp.le.s32.totalorder 2, %s14
      // Predicated region
      $region45: #{tpu_custom_call.1} parent=5 // pred_check
        %p470 = pneg %p469
      $region46: #{tpu_custom_call.1} parent=5 // pred_check_branch
        %472 = sbr.rel (%p470) target = $region48
      $region47: #{tpu_custom_call.1} parent=5 // pred_region
        %s473 = ssub.s32 %s14, 2
        // Predicated region
        $region49: #{tpu_custom_call.1} parent=47 // pred_check
          %p474 = pneg %p153
        $region50: #{tpu_custom_call.1} parent=47 // pred_check_branch
          %476 = sbr.rel (%p474) target = $region52
        $region51: #{tpu_custom_call.1} parent=47 // pred_region
          %s477 = sand.u32 %s138, 1
          %s478 = scalar_lea.sflag [#allocation3], %s477
          %s479 = sand.u32 %s138, 1
          %s480 = smul.addr %s479, 8
          %s481 = scalar_lea.vmem [#allocation2], %s480
          %483 = dma.done %s478, 128
        $region52: #{tpu_custom_call.1} parent=47 // pred_fallthru
          _
      $region48: #{tpu_custom_call.1} parent=5 // pred_fallthru
        _
    $region6: #{tpu_custom_call.1} parent=1 // loop_footer
      %s18 = sadd.s32 1, %s14
    $region7: #{tpu_custom_call.1} parent=1 // loop_footer_branch
      %13 = sbr.rel target = $region3
    $region8: #{tpu_custom_call.1} parent=1 // loop_exit
      _
    %484 = vsyncpa [#allocation3], 1
    %s485 = scalar_lea.sflag [#allocation3], 1
    %486 = vsyncpa %s485, 1

</llo_original>
